<compile_context>
chip_gen: v7x
topology: tpu7x:2x2x1
jax: 0.10.0
libtpu: 0.0.40
codegen_flags: <defaults>
</compile_context>

<pallas_src>
import jax
import jax.numpy as jnp
from jax import lax
from jax.experimental import pallas as pl
from jax.experimental.pallas import tpu as pltpu

# Keep the in-kernel MXU matmuls and the pure-JAX reference at the same
# (full-f32) matmul precision so the correctness check is meaningful.
jax.config.update("jax_default_matmul_precision", "highest")


# ----------------------------------------------------------------------------
# helpers
# ----------------------------------------------------------------------------
def _round_up(x, m):
    return (x + m - 1) // m * m


def _tile_and_pad(dim, target):
    """Pick a tile (full extent if dim <= target, else `target`) and the
    padded size. `target` must be a multiple of 128 (and therefore 8)."""
    if dim <= target:
        return dim, dim
    return target, _round_up(dim, target)


def _pad_axis(x, axis, new_size):
    if x.shape[axis] == new_size:
        return x
    pads = [(0, 0)] * x.ndim
    pads[axis] = (0, new_size - x.shape[axis])
    return jnp.pad(x, pads)


# ----------------------------------------------------------------------------
# tiled linear (matmul) kernels
# ----------------------------------------------------------------------------
def _matmul_kernel(x_ref, w_ref, o_ref, acc_ref):
    @pl.when(pl.program_id(2) == 0)
    def _():
        acc_ref[...] = jnp.zeros_like(acc_ref)

    acc_ref[...] += jnp.dot(x_ref[...], w_ref[...],
                            preferred_element_type=jnp.float32)

    @pl.when(pl.program_id(2) == pl.num_programs(2) - 1)
    def _():
        o_ref[...] = acc_ref[...].astype(o_ref.dtype)


def _matmul_bias_kernel(x_ref, w_ref, b_ref, o_ref, acc_ref):
    @pl.when(pl.program_id(2) == 0)
    def _():
        acc_ref[...] = jnp.zeros_like(acc_ref)

    acc_ref[...] += jnp.dot(x_ref[...], w_ref[...],
                            preferred_element_type=jnp.float32)

    @pl.when(pl.program_id(2) == pl.num_programs(2) - 1)
    def _():
        o_ref[...] = (acc_ref[...] +
                      b_ref[...].astype(jnp.float32)).astype(o_ref.dtype)


def pallas_linear(x2d, w, b=None, *, tm_target=256, tn_target=256,
                  tk_target=256):
    """y = x2d @ w (+ b).   x2d: (M, Din), w: (Din, Dout), b: (Dout,)."""
    M, Din = x2d.shape
    Dout = w.shape[1]

    tm, Mp = _tile_and_pad(M, tm_target)
    tk, Kp = _tile_and_pad(Din, tk_target)
    tn, Dp = _tile_and_pad(Dout, tn_target)

    xp = _pad_axis(_pad_axis(x2d, 0, Mp), 1, Kp)
    wp = _pad_axis(_pad_axis(w, 0, Kp), 1, Dp)

    grid = (Mp // tm, Dp // tn, Kp // tk)
    in_specs = [pl.BlockSpec((tm, tk), lambda i, j, k: (i, k)),
                pl.BlockSpec((tk, tn), lambda i, j, k: (k, j))]
    args = [xp, wp]
    if b is None:
        kernel = _matmul_kernel
    else:
        bp = _pad_axis(b.reshape(1, Dout), 1, Dp)
        in_specs.append(pl.BlockSpec((1, tn), lambda i, j, k: (0, j)))
        args.append(bp)
        kernel = _matmul_bias_kernel

    out = pl.pallas_call(
        kernel,
        out_shape=jax.ShapeDtypeStruct((Mp, Dp), x2d.dtype),
        grid=grid,
        in_specs=in_specs,
        out_specs=pl.BlockSpec((tm, tn), lambda i, j, k: (i, j)),
        scratch_shapes=[pltpu.VMEM((tm, tn), jnp.float32)],
        compiler_params=pltpu.CompilerParams(
            dimension_semantics=("parallel", "parallel", "arbitrary")),
        cost_estimate=pl.CostEstimate(
            flops=2 * Mp * Kp * Dp,
            transcendentals=0,
            bytes_accessed=4 * (Mp * Kp + Kp * Dp + Mp * Dp)),
    )(*args)
    return out[:M, :Dout]


# ----------------------------------------------------------------------------
# flash-style attention kernel (online softmax over kv blocks)
# ----------------------------------------------------------------------------
def _make_flash_kernel(*, scale, kv_len, tkv, has_mask, kv_pad):
    def kernel(*refs):
        if has_mask:
            q_ref, k_ref, v_ref, mask_ref, o_ref, m_scr, l_scr, acc_scr = refs
        else:
            q_ref, k_ref, v_ref, o_ref, m_scr, l_scr, acc_scr = refs
            mask_ref = None

        ki = pl.program_id(2)

        @pl.when(ki == 0)
        def _():
            m_scr[...] = jnp.full_like(m_scr, -jnp.finfo(jnp.float32).max)
            l_scr[...] = jnp.zeros_like(l_scr)
            acc_scr[...] = jnp.zeros_like(acc_scr)

        q = q_ref[0].astype(jnp.float32) * scale      # (tq, d)
        k = k_ref[0].astype(jnp.float32)              # (tkv, d)
        v = v_ref[0]                                  # (tkv, d)

        # contract the head dims directly (no explicit transpose of k)
        s = lax.dot_general(q, k, (((1,), (1,)), ((), ())),
                            preferred_element_type=jnp.float32)  # (tq, tkv)

        neg = -jnp.finfo(jnp.float32).max
        if has_mask:
            s = jnp.where(mask_ref[0] != 0, s, neg)
        if kv_pad and not has_mask:
            # mask zero-padded key positions
            kidx = ki * tkv + lax.broadcasted_iota(jnp.int32, (1, tkv), 1)
            s = jnp.where(kidx < kv_len, s, neg)

        m_prev = m_scr[...]                                        # (tq, 1)
        m_new = jnp.maximum(m_prev, jnp.max(s, axis=-1, keepdims=True))
        alpha = jnp.exp(m_prev - m_new)
        p = jnp.exp(s - m_new)                                     # (tq, tkv)

        l_scr[...] = alpha * l_scr[...] + jnp.sum(p, axis=-1, keepdims=True)
        acc_scr[...] = alpha * acc_scr[...] + lax.dot_general(
            p.astype(v.dtype), v, (((1,), (0,)), ((), ())),
            preferred_element_type=jnp.float32)
        m_scr[...] = m_new

        @pl.when(ki == pl.num_programs(2) - 1)
        def _():
            # exact normalization (l >= 1 always: the running max contributes
            # exp(0) = 1), avoids approx-reciprocal error
            o_ref[0] = (acc_scr[...] / l_scr[...]).astype(o_ref.dtype)

    return kernel


def pallas_flash_attention(q, k, v, scale, *, mask=None, n_heads=1,
                           tq_target=256, tkv_target=256):
    """q: (BH, N, d); k/v: (BH, M, d); mask: optional (B, M) int32 (BH=B*h)."""
    BH, N, d = q.shape
    M = k.shape[1]

    tq, Np = _tile_and_pad(N, tq_target)
    tkv, Mp = _tile_and_pad(M, tkv_target)

    qp = _pad_axis(q, 1, Np)
    kp = _pad_axis(k, 1, Mp)
    vp = _pad_axis(v, 1, Mp)

    grid = (BH, Np // tq, Mp // tkv)
    has_mask = mask is not None
    kv_pad = Mp > M

    in_specs = [
        pl.BlockSpec((1, tq, d), lambda bh, qi, ki: (bh, qi, 0)),
        pl.BlockSpec((1, tkv, d), lambda bh, qi, ki: (bh, ki, 0)),
        pl.BlockSpec((1, tkv, d), lambda bh, qi, ki: (bh, ki, 0)),
    ]
    args = [qp, kp, vp]
    if has_mask:
        # (B, 1, Mp); zero padding keeps padded keys masked
        mask_p = _pad_axis(mask.astype(jnp.int32), 1, Mp)[:, None, :]
        in_specs.append(
            pl.BlockSpec((1, 1, tkv),
                         lambda bh, qi, ki: (bh // n_heads, 0, ki)))
        args.append(mask_p)

    kernel = _make_flash_kernel(scale=scale, kv_len=M, tkv=tkv,
                                has_mask=has_mask, kv_pad=kv_pad)

    out = pl.pallas_call(
        kernel,
        out_shape=jax.ShapeDtypeStruct((BH, Np, d), q.dtype),
        grid=grid,
        in_specs=in_specs,
        out_specs=pl.BlockSpec((1, tq, d), lambda bh, qi, ki: (bh, qi, 0)),
        scratch_shapes=[pltpu.VMEM((tq, 1), jnp.float32),
                        pltpu.VMEM((tq, 1), jnp.float32),
                        pltpu.VMEM((tq, d), jnp.float32)],
        compiler_params=pltpu.CompilerParams(
            dimension_semantics=("parallel", "parallel", "arbitrary")),
        cost_estimate=pl.CostEstimate(
            flops=4 * BH * Np * Mp * d,
            transcendentals=BH * Np * Mp,
            bytes_accessed=4 * (qp.size + kp.size + vp.size + BH * Np * d)),
    )(*args)
    return out[:, :N, :]


# ----------------------------------------------------------------------------
# Attention module (forward only)
# ----------------------------------------------------------------------------
class AttentionPallas:
    def __init__(self, query_dim, context_dim=None, heads=8, dim_head=64,
                 drop_path_rate=0.0, key=None):
        inner_dim = dim_head * heads
        context_dim = context_dim if context_dim is not None else query_dim
        self.scale = dim_head ** (-0.5)
        self.heads = heads
        self.dim_head = dim_head
        self.query_dim = query_dim
        self.context_dim = context_dim
        self.inner_dim = inner_dim
        assert drop_path_rate == 0.0  # DropPath(0.0) == Identity

        key = key if key is not None else jax.random.PRNGKey(0)
        k1, k2, k3, k4 = jax.random.split(key, 4)
        # Deterministic synthetic parameters, stored transposed so forward is
        # x @ W (matches nn.Linear semantics).
        self.w_q = (jax.random.normal(k1, (query_dim, inner_dim), jnp.float32)
                    * (query_dim ** -0.5))
        self.w_kv = (jax.random.normal(k2, (context_dim, 2 * inner_dim),
                                       jnp.float32) * (context_dim ** -0.5))
        self.w_out = (jax.random.normal(k3, (inner_dim, query_dim),
                                        jnp.float32) * (inner_dim ** -0.5))
        self.b_out = jax.random.normal(k4, (query_dim,), jnp.float32) * 0.01
        # fused projection weight for self-attention (single read of x)
        self.w_qkv = jnp.concatenate([self.w_q, self.w_kv], axis=1)

    def _split_heads(self, t):
        # 'b n (h d) -> (b h) n d'
        B, N, _ = t.shape
        h, d = self.heads, self.dim_head
        return t.reshape(B, N, h, d).transpose(0, 2, 1, 3).reshape(B * h, N, d)

    def _merge_heads(self, t, B):
        # '(b h) n d -> b n (h d)'
        h, d = self.heads, self.dim_head
        N = t.shape[1]
        return t.reshape(B, h, N, d).transpose(0, 2, 1, 3).reshape(B, N, h * d)

    def __call__(self, x, context=None, mask=None):
        B, N, _ = x.shape
        inner = self.inner_dim

        if context is None:
            # fused q/kv projection: one pass over x
            qkv = pallas_linear(x.reshape(B * N, self.query_dim), self.w_qkv)
            qkv = qkv.reshape(B, N, 3 * inner)
            q = qkv[..., :inner]
            k = qkv[..., inner:2 * inner]
            v = qkv[..., 2 * inner:]
        else:
            Bc, M, _ = context.shape
            assert Bc == B, "cross-attention requires matching batch sizes"
            q = pallas_linear(x.reshape(B * N, self.query_dim), self.w_q)
            q = q.reshape(B, N, inner)
            kv = pallas_linear(context.reshape(Bc * M, self.context_dim),
                               self.w_kv)
            kv = kv.reshape(Bc, M, 2 * inner)
            k, v = kv[..., :inner], kv[..., inner:]

        q, k, v = map(self._split_heads, (q, k, v))   # (B*h, N|M, d)

        mask_b = None
        if mask is not None:
            mask_b = mask.reshape(B, -1).astype(jnp.int32)  # 'b ... -> b (...)'

        out = pallas_flash_attention(q, k, v, self.scale,
                                     mask=mask_b, n_heads=self.heads)
        out = self._merge_heads(out, B)                      # (B, N, inner)

        out = pallas_linear(out.reshape(B * N, inner), self.w_out, self.b_out)
        return out.reshape(B, N, self.query_dim)


# ----------------------------------------------------------------------------
# Pure-JAX reference for correctness sanity check
# ----------------------------------------------------------------------------
def reference_forward(mod, x, context=None, mask=None):
    context = context if context is not None else x
    q = x @ mod.w_q
    kv = context @ mod.w_kv
    k, v = kv[..., :mod.inner_dim], kv[..., mod.inner_dim:]
    q, k, v = map(mod._split_heads, (q, k, v))
    sim = jnp.einsum('bid,bjd->bij', q, k) * mod.scale
    if mask is not None:
        m = mask.reshape(mask.shape[0], -1)
        m = jnp.repeat(m, mod.heads, axis=0)[:, None, :]
        sim = jnp.where(m, sim, -jnp.finfo(sim.dtype).max)
    attn = jax.nn.softmax(sim, axis=-1)
    out = jnp.einsum('bij,bjd->bid', attn, v)
    out = mod._merge_heads(out, x.shape[0])
    return out @ mod.w_out + mod.b_out


def _check(a, b, tol=2e-2):
    # tolerance covers any residual MXU bf16-pass differences while still
    # catching structural bugs (those produce O(0.1..1) errors)
    return bool(jnp.allclose(a, b, atol=tol, rtol=tol))


# ----------------------------------------------------------------------------
if __name__ == "__main__":
    key = jax.random.PRNGKey(0)
    kx, kc, km, kp1, kp2, kx2 = jax.random.split(key, 6)

    # --- test 1: small self-attention, no mask ------------------------------
    B, N, query_dim = 2, 8, 32
    heads, dim_head = 2, 16                    # inner_dim = 32
    x = jax.random.normal(kx, (B, N, query_dim), jnp.float32)
    attn = AttentionPallas(query_dim=query_dim, heads=heads,
                           dim_head=dim_head, key=kp1)
    out = jax.block_until_ready(attn(x))
    ref = reference_forward(attn, x)
    assert out.shape == (B, N, query_dim)
    assert _check(out, ref), float(jnp.max(jnp.abs(out - ref)))

    # --- test 2: small cross-attention with a boolean mask ------------------
    Mctx = 12
    ctx = jax.random.normal(kc, (B, Mctx, query_dim), jnp.float32)
    mask = jax.random.bernoulli(km, 0.7, (B, Mctx))
    out_m = jax.block_until_ready(attn(x, context=ctx, mask=mask))
    ref_m = reference_forward(attn, x, context=ctx, mask=mask)
    assert _check(out_m, ref_m), float(jnp.max(jnp.abs(out_m - ref_m)))

    # --- test 3: medium self-attention exercising multi-block flash path ----
    B2, N2, qd2, h2, dh2 = 1, 384, 64, 2, 32   # pads to 512, 2 q / 2 kv blocks
    attn2 = AttentionPallas(query_dim=qd2, heads=h2, dim_head=dh2, key=kp2)
    x2 = jax.random.normal(kx2, (B2, N2, qd2), jnp.float32)
    out2 = jax.block_until_ready(attn2(x2))
    ref2 = reference_forward(attn2, x2)
    assert _check(out2, ref2), float(jnp.max(jnp.abs(out2 - ref2)))

    print("KERNEL_OK")
</pallas_src>

<mosaic_0001>
module attributes {stable_mosaic.version = 11 : i64} {
  func.func @_matmul_kernel(%arg0: i32, %arg1: i32, %arg2: i32, %arg3: memref<16x32xf32, #tpu.memory_space<vmem>>, %arg4: memref<32x96xf32, #tpu.memory_space<vmem>>, %arg5: memref<16x96xf32, #tpu.memory_space<vmem>>, %arg6: memref<16x96xf32, #tpu.memory_space<vmem>>) attributes {dimension_semantics = [#tpu.dimension_semantics<parallel>, #tpu.dimension_semantics<parallel>, #tpu.dimension_semantics<arbitrary>], iteration_bounds = array<i64: 1, 1, 1>, scalar_prefetch = 0 : i64, scratch_operands = 1 : i64, tpu.core_type = #tpu.core_type<tc>, window_params = [{transform_indices = @transform_0, window_bounds = array<i64: 16, 32>}, {transform_indices = @transform_1, window_bounds = array<i64: 32, 96>}, {transform_indices = @transform_2, window_bounds = array<i64: 16, 96>}]} {
    %c0_i32 = arith.constant 0 : i32
    %0 = arith.cmpi eq, %arg2, %c0_i32 : i32
    %1 = arith.extui %0 : i1 to i32
    %c0_i32_0 = arith.constant 0 : i32
    %2 = arith.cmpi ne, %1, %c0_i32_0 : i32
    scf.if %2 {
      %cst_10 = arith.constant 0.000000e+00 : f32
      %12 = vector.broadcast %cst_10 : f32 to vector<16x96xf32>
      %c0_11 = arith.constant 0 : index
      %c0_12 = arith.constant 0 : index
      %13 = vector.load %arg6[%c0_11, %c0_12] : memref<16x96xf32, #tpu.memory_space<vmem>>, vector<16x96xf32>
      tpu.vector_store %arg6[%c0_11, %c0_12], %12 {strides = array<i32>} : memref<16x96xf32, #tpu.memory_space<vmem>>, vector<16x96xf32>,
    } else {
    }
    %c0 = arith.constant 0 : index
    %c0_1 = arith.constant 0 : index
    %3 = vector.load %arg6[%c0, %c0_1] : memref<16x96xf32, #tpu.memory_space<vmem>>, vector<16x96xf32>
    %c0_2 = arith.constant 0 : index
    %c0_3 = arith.constant 0 : index
    %4 = vector.load %arg3[%c0_2, %c0_3] : memref<16x32xf32, #tpu.memory_space<vmem>>, vector<16x32xf32>
    %c0_4 = arith.constant 0 : index
    %c0_5 = arith.constant 0 : index
    %5 = vector.load %arg4[%c0_4, %c0_5] : memref<32x96xf32, #tpu.memory_space<vmem>>, vector<32x96xf32>
    %cst = arith.constant dense<0.000000e+00> : vector<16x96xf32>
    %6 = tpu.matmul %4, %5, %cst {dimension_numbers = #tpu.dot_dimension_numbers<[1], [0], [0], [1], [0, 0, 1, 1], [], []>, precision = #tpu.contract_precision<fp32>} : vector<16x32xf32>, vector<32x96xf32>, vector<16x96xf32> -> vector<16x96xf32>
    %7 = arith.addf %3, %6 : vector<16x96xf32>
    %c0_6 = arith.constant 0 : index
    %c0_7 = arith.constant 0 : index
    %8 = vector.load %arg6[%c0_6, %c0_7] : memref<16x96xf32, #tpu.memory_space<vmem>>, vector<16x96xf32>
    tpu.vector_store %arg6[%c0_6, %c0_7], %7 {strides = array<i32>} : memref<16x96xf32, #tpu.memory_space<vmem>>, vector<16x96xf32>,
    %c0_i32_8 = arith.constant 0 : i32
    %9 = arith.cmpi eq, %arg2, %c0_i32_8 : i32
    %10 = arith.extui %9 : i1 to i32
    %c0_i32_9 = arith.constant 0 : i32
    %11 = arith.cmpi ne, %10, %c0_i32_9 : i32
    scf.if %11 {
      %c0_10 = arith.constant 0 : index
      %c0_11 = arith.constant 0 : index
      %12 = vector.load %arg6[%c0_10, %c0_11] : memref<16x96xf32, #tpu.memory_space<vmem>>, vector<16x96xf32>
      %c0_12 = arith.constant 0 : index
      %c0_13 = arith.constant 0 : index
      %13 = vector.load %arg5[%c0_12, %c0_13] : memref<16x96xf32, #tpu.memory_space<vmem>>, vector<16x96xf32>
      tpu.vector_store %arg5[%c0_12, %c0_13], %12 {strides = array<i32>} : memref<16x96xf32, #tpu.memory_space<vmem>>, vector<16x96xf32>,
    } else {
    }
    return
  }
  func.func @transform_0(%arg0: i32, %arg1: i32, %arg2: i32) -> (i32, i32) {
    %c0_i32 = arith.constant 0 : i32
    return %arg0, %arg2 : i32, i32
  }
  func.func @transform_1(%arg0: i32, %arg1: i32, %arg2: i32) -> (i32, i32) {
    %c0_i32 = arith.constant 0 : i32
    return %arg2, %arg1 : i32, i32
  }
  func.func @transform_2(%arg0: i32, %arg1: i32, %arg2: i32) -> (i32, i32) {
    %c0_i32 = arith.constant 0 : i32
    return %arg0, %arg1 : i32, i32
  }
}

</mosaic_0001>

<llo_original>
// kernel: tpu_custom_call.1
$region0: #{tpu_custom_call.1}
  #allocation0 [shape = 'u32[]', space=smem, size = 0x4, offset = 0x4, fixed_abs, tag = 'smem constant byte address 0x4 - core index']
  #allocation1 [shape = 'u32[144,128]{1,0:T(1,128)}', space=vmem, size = 0x12000, scoped, tag = 'internal scratch']
  #allocation2 [shape = 'f32[16,96]{1,0:T(8,128)}', space=vmem, size = 0x2000, scoped, tag = 'scratch operand']
  %s0 = inlined_call_operand.hbm [shape: f32[16,32], index: 0, kind: input, shape index: {}]
  %s1 = inlined_call_operand.hbm [shape: f32[32,96], index: 1, kind: input, shape index: {}]
  %s2 = inlined_call_operand.hbm [shape: f32[16,96], index: 2, kind: output, shape index: {}]
  %s3 = sld [smem:[#allocation0]]
  $region34: #{tpu_custom_call.1} parent=0
    _
  %s5 = ssub.s32 1, %s3
  %s6 = scalar_select 0, %s5, %s3
  $region1: #{tpu_custom_call.1} parent=0
    #allocation3 [shape = 'u8[8192]{0}', space=vmem, size = 0x2000, scoped, tag = 'input window, operand 0, single buffered']
    #allocation4 [shape = 's32[1]{0}', space=sflag, size = 0x4, scoped, tag = 'scoped memory for tpu_custom_call.1']
    #allocation5 [shape = 's32[1]{0}', space=sflag, size = 0x4, scoped, tag = 'scoped memory for tpu_custom_call.1']
    #allocation6 [shape = 'u8[16384]{0}', space=vmem, size = 0x4000, scoped, tag = 'input window, operand 1, single buffered']
    #allocation7 [shape = 's32[1]{0}', space=sflag, size = 0x4, scoped, tag = 'scoped memory for tpu_custom_call.1']
    #allocation8 [shape = 'u8[8192]{0}', space=vmem, size = 0x2000, scoped, tag = 'output window, operand 0, single buffered']
    %7 = vsyncpa [#allocation4], 0
    %8 = vsyncpa [#allocation7], 0
    %9 = vsyncpa [#allocation5], 0
    // Predicated region
    $region2: #{tpu_custom_call.1} parent=1 // pred_check
      _
    $region3: #{tpu_custom_call.1} parent=1 // pred_check_branch
      %11 = sbr.rel (0) target = $region5
    $region4: #{tpu_custom_call.1} parent=1 // pred_region
      %s13 = ssub.s32 256, 256
      %14 = vsyncadd [#allocation4], %s13
      %s15 = sshll.u32 [#allocation3], 4
      %s16 = int_to_ptr.vmem [resolvable:$true] %s15
      %21 = dma.hbm_to_vmem [thread:$0]  %s0, 256, %s16, [#allocation4], 128, 128, 8
    $region5: #{tpu_custom_call.1} parent=1 // pred_fallthru
      _
    // Predicated region
    $region6: #{tpu_custom_call.1} parent=1 // pred_check
      _
    $region7: #{tpu_custom_call.1} parent=1 // pred_check_branch
      %23 = sbr.rel (0) target = $region9
    $region8: #{tpu_custom_call.1} parent=1 // pred_region
      %s25 = ssub.s32 512, 512
      %26 = vsyncadd [#allocation7], %s25
      %s27 = sshll.u32 [#allocation6], 4
      %s28 = int_to_ptr.vmem [resolvable:$true] %s27
      %33 = dma.hbm_to_vmem [thread:$0]  %s1, 512, %s28, [#allocation7], 128, 128, 8
    $region9: #{tpu_custom_call.1} parent=1 // pred_fallthru
      _
    // Predicated region
    $region10: #{tpu_custom_call.1} parent=1 // pred_check
      _
    $region11: #{tpu_custom_call.1} parent=1 // pred_check_branch
      %35 = sbr.rel (0) target = $region13
    $region12: #{tpu_custom_call.1} parent=1 // pred_region
      %36 = dma.done [#allocation4], 256
    $region13: #{tpu_custom_call.1} parent=1 // pred_fallthru
      _
    // Predicated region
    $region14: #{tpu_custom_call.1} parent=1 // pred_check
      _
    $region15: #{tpu_custom_call.1} parent=1 // pred_check_branch
      %38 = sbr.rel (0) target = $region17
    $region16: #{tpu_custom_call.1} parent=1 // pred_region
      %39 = dma.done [#allocation7], 512
    $region17: #{tpu_custom_call.1} parent=1 // pred_fallthru
      _
    %p40 = scmp.eq.s32.totalorder 0, 0
    // Predicated region
    $region18: #{tpu_custom_call.1} parent=1 // pred_check
      %p41 = pneg %p40
    $region19: #{tpu_custom_call.1} parent=1 // pred_check_branch
      %43 = sbr.rel (%p41) target = $region21
    $region20: #{tpu_custom_call.1} parent=1 // pred_region
      %vm44 = vcmask 785408
      %45 = vst.msk [vmem:[#allocation2] sm:$0xff] %vm44, 0.0
      %46 = vst.msk [vmem:[#allocation2 + $0x8] sm:$0xff] %vm44, 0.0
    $region21: #{tpu_custom_call.1} parent=1 // pred_fallthru
      _
    %v47 = vld [vmem:[#allocation2] sm:$0xff]
    %v48 = vld [vmem:[#allocation2 + $0x8] sm:$0xff]
    %v49 = vld [vmem:[#allocation3] sm:$0xff]
    %v50 = vld [vmem:[#allocation3 + $0x8] sm:$0xff]
    %v51 = vld [vmem:[#allocation6] sm:$0xff]
    %v52 = vld [vmem:[#allocation6 + $0x8] sm:$0xff]
    %v53 = vld [vmem:[#allocation6 + $0x10] sm:$0xff]
    %v54 = vld [vmem:[#allocation6 + $0x18] sm:$0xff]
    %vm55 = vcmask 261120
    %v57 = vsel %vm55, %v49, 0
    %v60 = vsel %vm55, %v50, 0
    %62 = vmatprep.subr.mxu0 0.0
    %v63 = vand.u32 %v51, 4294901760
    %64 = vmatpush1.msra.mxu0 %v63
    %65 = vmatprep.subr.mxu0 0.0
    %v66 = vand.u32 %v52, 4294901760
    %67 = vmatpush1.msra.mxu0 %v66
    %68 = vmatprep.subr.mxu0 0.0
    %v69 = vand.u32 %v53, 4294901760
    %70 = vmatpush1.msra.mxu0 %v69
    %71 = vmatprep.subr.mxu0 0.0
    %v72 = vand.u32 %v54, 4294901760
    %73 = vmatpush1.msra.mxu0 %v72
    %74 = vmatprep.subr.mxu0 0.0
    %75 = vmatpush1.msra.mxu0 0.0
    %76 = vmatprep.subr.mxu0 0.0
    %77 = vmatpush1.msra.mxu0 0.0
    %78 = vmatprep.subr.mxu0 0.0
    %79 = vmatpush1.msra.mxu0 0.0
    %80 = vmatprep.subr.mxu0 0.0
    %81 = vmatpush1.msra.mxu0 0.0
    %82 = vmatprep.subr.mxu0 0.0
    %83 = vmatpush1.msra.mxu0 0.0
    %84 = vmatprep.subr.mxu0 0.0
    %85 = vmatpush1.msra.mxu0 0.0
    %86 = vmatprep.subr.mxu0 0.0
    %87 = vmatpush1.msra.mxu0 0.0
    %88 = vmatprep.subr.mxu0 0.0
    %89 = vmatpush1.msra.mxu0 0.0
    %90 = vmatprep.subr.mxu0 0.0
    %91 = vmatpush1.msra.mxu0 0.0
    %92 = vmatprep.subr.mxu0 0.0
    %93 = vmatpush1.msra.mxu0 0.0
    %94 = vmatprep.subr.mxu0 0.0
    %95 = vmatpush1.msra.mxu0 0.0
    %96 = vmatprep.subr.mxu0 0.0
    %97 = vmatpush1.msra.mxu0 0.0
    %98 = vmatprep.subr.mxu0 0.0
    %99 = vmatpush1.msra.mxu0 0.0
    %100 = vmatprep.subr.mxu0 0.0
    %101 = vmatpush1.msra.mxu0 0.0
    %102 = vmatprep.subr.mxu0 0.0
    %103 = vmatpush1.msra.mxu0 0.0
    %104 = vmatprep.subr.mxu0 0.0
    %105 = vmatpush1.msra.mxu0 0.0
    %106 = vmatprep.subr.mxu0 0.0
    %107 = vmatpush1.msra.mxu0 0.0
    %108 = vmatprep.subr.mxu0 0.0
    %109 = vmatpush1.msra.mxu0 0.0
    %110 = vmatprep.subr.mxu0 0.0
    %111 = vmatpush1.msra.mxu0 0.0
    %112 = vmatprep.subr.mxu0 0.0
    %113 = vmatpush1.msra.mxu0 0.0
    %114 = vmatprep.subr.mxu0 0.0
    %115 = vmatpush1.msra.mxu0 0.0
    %116 = vmatprep.subr.mxu0 0.0
    %117 = vmatpush1.msra.mxu0 0.0
    %118 = vmatprep.subr.mxu0 0.0
    %119 = vmatpush1.msra.mxu0 0.0
    %120 = vmatprep.subr.mxu0 0.0
    %121 = vmatpush1.msra.mxu0 0.0
    %122 = vmatprep.subr.mxu0 0.0
    %123 = vmatpush1.msra.mxu0 0.0
    %124 = vmatprep.subr.mxu0 0.0
    %125 = vmatpush1.msra.mxu0 0.0
    %126 = vmatprep.subr.mxu0 0.0
    %127 = vmatpush1.msra.mxu0 0.0
    %128 = vmatprep.subr.mxu0 0.0
    %129 = vmatpush1.msra.mxu0 0.0
    %130 = vmatprep.mubr.f32.mxu0 0.0
    %v131 = vand.u32 %v57, 4294901760
    %v132 = vsub.f32 %v57, %v131
    %v133 = vand.u32 %v132, 4294901760
    %v134 = vsub.f32 %v132, %v133
    %v135 = vand.u32 %v134, 4294901760
    %136 = vmatmul.mubr.f32.gmra.mrb[0].mxu0 %v135
    %v137 = vpop.f32.mrb[0].mxu0
    %v138 = vadd.f32 0.0, %v137
    %v139 = vpop.f32.mrb[0].mxu0
    %140 = vmatprep.mubr.f32.mxu0 0.0
    %v141 = vand.u32 %v60, 4294901760
    %v142 = vsub.f32 %v60, %v141
    %v143 = vand.u32 %v142, 4294901760
    %v144 = vsub.f32 %v142, %v143
    %v145 = vand.u32 %v144, 4294901760
    %146 = vmatmul.mubr.f32.gmra.mrb[0].mxu0 %v145
    %v147 = vpop.f32.mrb[0].mxu0
    %v148 = vadd.f32 0.0, %v147
    %v149 = vpop.f32.mrb[0].mxu0
    %150 = vdwg.mxu0
    %151 = vmatprep.subr.mxu0 0.0
    %v152 = vand.u32 %v51, 4294901760
    %v153 = vsub.f32 %v51, %v152
    %v154 = vand.u32 %v153, 4294901760
    %v155 = vsub.f32 %v153, %v154
    %v156 = vand.u32 %v155, 4294901760
    %157 = vmatpush1.msra.mxu0 %v156
    %158 = vmatprep.subr.mxu0 0.0
    %v159 = vand.u32 %v52, 4294901760
    %v160 = vsub.f32 %v52, %v159
    %v161 = vand.u32 %v160, 4294901760
    %v162 = vsub.f32 %v160, %v161
    %v163 = vand.u32 %v162, 4294901760
    %164 = vmatpush1.msra.mxu0 %v163
    %165 = vmatprep.subr.mxu0 0.0
    %v166 = vand.u32 %v53, 4294901760
    %v167 = vsub.f32 %v53, %v166
    %v168 = vand.u32 %v167, 4294901760
    %v169 = vsub.f32 %v167, %v168
    %v170 = vand.u32 %v169, 4294901760
    %171 = vmatpush1.msra.mxu0 %v170
    %172 = vmatprep.subr.mxu0 0.0
    %v173 = vand.u32 %v54, 4294901760
    %v174 = vsub.f32 %v54, %v173
    %v175 = vand.u32 %v174, 4294901760
    %v176 = vsub.f32 %v174, %v175
    %v177 = vand.u32 %v176, 4294901760
    %178 = vmatpush1.msra.mxu0 %v177
    %179 = vmatprep.subr.mxu0 0.0
    %180 = vmatpush1.msra.mxu0 0.0
    %181 = vmatprep.subr.mxu0 0.0
    %182 = vmatpush1.msra.mxu0 0.0
    %183 = vmatprep.subr.mxu0 0.0
    %184 = vmatpush1.msra.mxu0 0.0
    %185 = vmatprep.subr.mxu0 0.0
    %186 = vmatpush1.msra.mxu0 0.0
    %187 = vmatprep.subr.mxu0 0.0
    %188 = vmatpush1.msra.mxu0 0.0
    %189 = vmatprep.subr.mxu0 0.0
    %190 = vmatpush1.msra.mxu0 0.0
    %191 = vmatprep.subr.mxu0 0.0
    %192 = vmatpush1.msra.mxu0 0.0
    %193 = vmatprep.subr.mxu0 0.0
    %194 = vmatpush1.msra.mxu0 0.0
    %195 = vmatprep.subr.mxu0 0.0
    %196 = vmatpush1.msra.mxu0 0.0
    %197 = vmatprep.subr.mxu0 0.0
    %198 = vmatpush1.msra.mxu0 0.0
    %199 = vmatprep.subr.mxu0 0.0
    %200 = vmatpush1.msra.mxu0 0.0
    %201 = vmatprep.subr.mxu0 0.0
    %202 = vmatpush1.msra.mxu0 0.0
    %203 = vmatprep.subr.mxu0 0.0
    %204 = vmatpush1.msra.mxu0 0.0
    %205 = vmatprep.subr.mxu0 0.0
    %206 = vmatpush1.msra.mxu0 0.0
    %207 = vmatprep.subr.mxu0 0.0
    %208 = vmatpush1.msra.mxu0 0.0
    %209 = vmatprep.subr.mxu0 0.0
    %210 = vmatpush1.msra.mxu0 0.0
    %211 = vmatprep.subr.mxu0 0.0
    %212 = vmatpush1.msra.mxu0 0.0
    %213 = vmatprep.subr.mxu0 0.0
    %214 = vmatpush1.msra.mxu0 0.0
    %215 = vmatprep.subr.mxu0 0.0
    %216 = vmatpush1.msra.mxu0 0.0
    %217 = vmatprep.subr.mxu0 0.0
    %218 = vmatpush1.msra.mxu0 0.0
    %219 = vmatprep.subr.mxu0 0.0
    %220 = vmatpush1.msra.mxu0 0.0
    %221 = vmatprep.subr.mxu0 0.0
    %222 = vmatpush1.msra.mxu0 0.0
    %223 = vmatprep.subr.mxu0 0.0
    %224 = vmatpush1.msra.mxu0 0.0
    %225 = vmatprep.subr.mxu0 0.0
    %226 = vmatpush1.msra.mxu0 0.0
    %227 = vmatprep.subr.mxu0 0.0
    %228 = vmatpush1.msra.mxu0 0.0
    %229 = vmatprep.subr.mxu0 0.0
    %230 = vmatpush1.msra.mxu0 0.0
    %231 = vmatprep.subr.mxu0 0.0
    %232 = vmatpush1.msra.mxu0 0.0
    %233 = vmatprep.subr.mxu0 0.0
    %234 = vmatpush1.msra.mxu0 0.0
    %235 = vmatprep.mubr.f32.mxu0 0.0
    %v236 = vand.u32 %v57, 4294901760
    %237 = vmatmul.mubr.f32.gmra.mrb[0].mxu0 %v236
    %v238 = vpop.f32.mrb[0].mxu0
    %v239 = vadd.f32 %v138, %v238
    %v240 = vpop.f32.mrb[0].mxu0
    %241 = vmatprep.mubr.f32.mxu0 0.0
    %v242 = vand.u32 %v60, 4294901760
    %243 = vmatmul.mubr.f32.gmra.mrb[0].mxu0 %v242
    %v244 = vpop.f32.mrb[0].mxu0
    %v245 = vadd.f32 %v148, %v244
    %v246 = vpop.f32.mrb[0].mxu0
    %247 = vdwg.mxu0
    %248 = vmatprep.subr.mxu0 0.0
    %v249 = vand.u32 %v51, 4294901760
    %v250 = vsub.f32 %v51, %v249
    %251 = vmatpush1.msra.mxu0 %v250
    %252 = vmatprep.subr.mxu0 0.0
    %v253 = vand.u32 %v52, 4294901760
    %v254 = vsub.f32 %v52, %v253
    %255 = vmatpush1.msra.mxu0 %v254
    %256 = vmatprep.subr.mxu0 0.0
    %v257 = vand.u32 %v53, 4294901760
    %v258 = vsub.f32 %v53, %v257
    %259 = vmatpush1.msra.mxu0 %v258
    %260 = vmatprep.subr.mxu0 0.0
    %v261 = vand.u32 %v54, 4294901760
    %v262 = vsub.f32 %v54, %v261
    %263 = vmatpush1.msra.mxu0 %v262
    %264 = vmatprep.subr.mxu0 0.0
    %265 = vmatpush1.msra.mxu0 0.0
    %266 = vmatprep.subr.mxu0 0.0
    %267 = vmatpush1.msra.mxu0 0.0
    %268 = vmatprep.subr.mxu0 0.0
    %269 = vmatpush1.msra.mxu0 0.0
    %270 = vmatprep.subr.mxu0 0.0
    %271 = vmatpush1.msra.mxu0 0.0
    %272 = vmatprep.subr.mxu0 0.0
    %273 = vmatpush1.msra.mxu0 0.0
    %274 = vmatprep.subr.mxu0 0.0
    %275 = vmatpush1.msra.mxu0 0.0
    %276 = vmatprep.subr.mxu0 0.0
    %277 = vmatpush1.msra.mxu0 0.0
    %278 = vmatprep.subr.mxu0 0.0
    %279 = vmatpush1.msra.mxu0 0.0
    %280 = vmatprep.subr.mxu0 0.0
    %281 = vmatpush1.msra.mxu0 0.0
    %282 = vmatprep.subr.mxu0 0.0
    %283 = vmatpush1.msra.mxu0 0.0
    %284 = vmatprep.subr.mxu0 0.0
    %285 = vmatpush1.msra.mxu0 0.0
    %286 = vmatprep.subr.mxu0 0.0
    %287 = vmatpush1.msra.mxu0 0.0
    %288 = vmatprep.subr.mxu0 0.0
    %289 = vmatpush1.msra.mxu0 0.0
    %290 = vmatprep.subr.mxu0 0.0
    %291 = vmatpush1.msra.mxu0 0.0
    %292 = vmatprep.subr.mxu0 0.0
    %293 = vmatpush1.msra.mxu0 0.0
    %294 = vmatprep.subr.mxu0 0.0
    %295 = vmatpush1.msra.mxu0 0.0
    %296 = vmatprep.subr.mxu0 0.0
    %297 = vmatpush1.msra.mxu0 0.0
    %298 = vmatprep.subr.mxu0 0.0
    %299 = vmatpush1.msra.mxu0 0.0
    %300 = vmatprep.subr.mxu0 0.0
    %301 = vmatpush1.msra.mxu0 0.0
    %302 = vmatprep.subr.mxu0 0.0
    %303 = vmatpush1.msra.mxu0 0.0
    %304 = vmatprep.subr.mxu0 0.0
    %305 = vmatpush1.msra.mxu0 0.0
    %306 = vmatprep.subr.mxu0 0.0
    %307 = vmatpush1.msra.mxu0 0.0
    %308 = vmatprep.subr.mxu0 0.0
    %309 = vmatpush1.msra.mxu0 0.0
    %310 = vmatprep.subr.mxu0 0.0
    %311 = vmatpush1.msra.mxu0 0.0
    %312 = vmatprep.subr.mxu0 0.0
    %313 = vmatpush1.msra.mxu0 0.0
    %314 = vmatprep.subr.mxu0 0.0
    %315 = vmatpush1.msra.mxu0 0.0
    %316 = vmatprep.subr.mxu0 0.0
    %317 = vmatpush1.msra.mxu0 0.0
    %318 = vmatprep.subr.mxu0 0.0
    %319 = vmatpush1.msra.mxu0 0.0
    %320 = vmatprep.mubr.f32.mxu0 0.0
    %v321 = vand.u32 %v57, 4294901760
    %v322 = vsub.f32 %v57, %v321
    %323 = vmatmul.mubr.f32.gmra.mrb[0].mxu0 %v322
    %v324 = vpop.f32.mrb[0].mxu0
    %v325 = vadd.f32 %v239, %v324
    %v326 = vpop.f32.mrb[0].mxu0
    %327 = vmatprep.mubr.f32.mxu0 0.0
    %v328 = vand.u32 %v60, 4294901760
    %v329 = vsub.f32 %v60, %v328
    %330 = vmatmul.mubr.f32.gmra.mrb[0].mxu0 %v329
    %v331 = vpop.f32.mrb[0].mxu0
    %v332 = vadd.f32 %v245, %v331
    %v333 = vpop.f32.mrb[0].mxu0
    %334 = vdwg.mxu0
    %335 = vmatprep.subr.mxu0 0.0
    %v336 = vand.u32 %v51, 4294901760
    %337 = vmatpush1.msra.mxu0 %v336
    %338 = vmatprep.subr.mxu0 0.0
    %v339 = vand.u32 %v52, 4294901760
    %340 = vmatpush1.msra.mxu0 %v339
    %341 = vmatprep.subr.mxu0 0.0
    %v342 = vand.u32 %v53, 4294901760
    %343 = vmatpush1.msra.mxu0 %v342
    %344 = vmatprep.subr.mxu0 0.0
    %v345 = vand.u32 %v54, 4294901760
    %346 = vmatpush1.msra.mxu0 %v345
    %347 = vmatprep.subr.mxu0 0.0
    %348 = vmatpush1.msra.mxu0 0.0
    %349 = vmatprep.subr.mxu0 0.0
    %350 = vmatpush1.msra.mxu0 0.0
    %351 = vmatprep.subr.mxu0 0.0
    %352 = vmatpush1.msra.mxu0 0.0
    %353 = vmatprep.subr.mxu0 0.0
    %354 = vmatpush1.msra.mxu0 0.0
    %355 = vmatprep.subr.mxu0 0.0
    %356 = vmatpush1.msra.mxu0 0.0
    %357 = vmatprep.subr.mxu0 0.0
    %358 = vmatpush1.msra.mxu0 0.0
    %359 = vmatprep.subr.mxu0 0.0
    %360 = vmatpush1.msra.mxu0 0.0
    %361 = vmatprep.subr.mxu0 0.0
    %362 = vmatpush1.msra.mxu0 0.0
    %363 = vmatprep.subr.mxu0 0.0
    %364 = vmatpush1.msra.mxu0 0.0
    %365 = vmatprep.subr.mxu0 0.0
    %366 = vmatpush1.msra.mxu0 0.0
    %367 = vmatprep.subr.mxu0 0.0
    %368 = vmatpush1.msra.mxu0 0.0
    %369 = vmatprep.subr.mxu0 0.0
    %370 = vmatpush1.msra.mxu0 0.0
    %371 = vmatprep.subr.mxu0 0.0
    %372 = vmatpush1.msra.mxu0 0.0
    %373 = vmatprep.subr.mxu0 0.0
    %374 = vmatpush1.msra.mxu0 0.0
    %375 = vmatprep.subr.mxu0 0.0
    %376 = vmatpush1.msra.mxu0 0.0
    %377 = vmatprep.subr.mxu0 0.0
    %378 = vmatpush1.msra.mxu0 0.0
    %379 = vmatprep.subr.mxu0 0.0
    %380 = vmatpush1.msra.mxu0 0.0
    %381 = vmatprep.subr.mxu0 0.0
    %382 = vmatpush1.msra.mxu0 0.0
    %383 = vmatprep.subr.mxu0 0.0
    %384 = vmatpush1.msra.mxu0 0.0
    %385 = vmatprep.subr.mxu0 0.0
    %386 = vmatpush1.msra.mxu0 0.0
    %387 = vmatprep.subr.mxu0 0.0
    %388 = vmatpush1.msra.mxu0 0.0
    %389 = vmatprep.subr.mxu0 0.0
    %390 = vmatpush1.msra.mxu0 0.0
    %391 = vmatprep.subr.mxu0 0.0
    %392 = vmatpush1.msra.mxu0 0.0
    %393 = vmatprep.subr.mxu0 0.0
    %394 = vmatpush1.msra.mxu0 0.0
    %395 = vmatprep.subr.mxu0 0.0
    %396 = vmatpush1.msra.mxu0 0.0
    %397 = vmatprep.subr.mxu0 0.0
    %398 = vmatpush1.msra.mxu0 0.0
    %399 = vmatprep.subr.mxu0 0.0
    %400 = vmatpush1.msra.mxu0 0.0
    %401 = vmatprep.subr.mxu0 0.0
    %402 = vmatpush1.msra.mxu0 0.0
    %403 = vmatprep.mubr.f32.mxu0 0.0
    %v404 = vand.u32 %v57, 4294901760
    %v405 = vsub.f32 %v57, %v404
    %v406 = vand.u32 %v405, 4294901760
    %407 = vmatmul.mubr.f32.gmra.mrb[0].mxu0 %v406
    %v408 = vpop.f32.mrb[0].mxu0
    %v409 = vadd.f32 %v325, %v408
    %v410 = vpop.f32.mrb[0].mxu0
    %411 = vmatprep.mubr.f32.mxu0 0.0
    %v412 = vand.u32 %v60, 4294901760
    %v413 = vsub.f32 %v60, %v412
    %v414 = vand.u32 %v413, 4294901760
    %415 = vmatmul.mubr.f32.gmra.mrb[0].mxu0 %v414
    %v416 = vpop.f32.mrb[0].mxu0
    %v417 = vadd.f32 %v332, %v416
    %v418 = vpop.f32.mrb[0].mxu0
    %419 = vdwg.mxu0
    %420 = vmatprep.subr.mxu0 0.0
    %v421 = vand.u32 %v51, 4294901760
    %v422 = vsub.f32 %v51, %v421
    %v423 = vand.u32 %v422, 4294901760
    %424 = vmatpush1.msra.mxu0 %v423
    %425 = vmatprep.subr.mxu0 0.0
    %v426 = vand.u32 %v52, 4294901760
    %v427 = vsub.f32 %v52, %v426
    %v428 = vand.u32 %v427, 4294901760
    %429 = vmatpush1.msra.mxu0 %v428
    %430 = vmatprep.subr.mxu0 0.0
    %v431 = vand.u32 %v53, 4294901760
    %v432 = vsub.f32 %v53, %v431
    %v433 = vand.u32 %v432, 4294901760
    %434 = vmatpush1.msra.mxu0 %v433
    %435 = vmatprep.subr.mxu0 0.0
    %v436 = vand.u32 %v54, 4294901760
    %v437 = vsub.f32 %v54, %v436
    %v438 = vand.u32 %v437, 4294901760
    %439 = vmatpush1.msra.mxu0 %v438
    %440 = vmatprep.subr.mxu0 0.0
    %441 = vmatpush1.msra.mxu0 0.0
    %442 = vmatprep.subr.mxu0 0.0
    %443 = vmatpush1.msra.mxu0 0.0
    %444 = vmatprep.subr.mxu0 0.0
    %445 = vmatpush1.msra.mxu0 0.0
    %446 = vmatprep.subr.mxu0 0.0
    %447 = vmatpush1.msra.mxu0 0.0
    %448 = vmatprep.subr.mxu0 0.0
    %449 = vmatpush1.msra.mxu0 0.0
    %450 = vmatprep.subr.mxu0 0.0
    %451 = vmatpush1.msra.mxu0 0.0
    %452 = vmatprep.subr.mxu0 0.0
    %453 = vmatpush1.msra.mxu0 0.0
    %454 = vmatprep.subr.mxu0 0.0
    %455 = vmatpush1.msra.mxu0 0.0
    %456 = vmatprep.subr.mxu0 0.0
    %457 = vmatpush1.msra.mxu0 0.0
    %458 = vmatprep.subr.mxu0 0.0
    %459 = vmatpush1.msra.mxu0 0.0
    %460 = vmatprep.subr.mxu0 0.0
    %461 = vmatpush1.msra.mxu0 0.0
    %462 = vmatprep.subr.mxu0 0.0
    %463 = vmatpush1.msra.mxu0 0.0
    %464 = vmatprep.subr.mxu0 0.0
    %465 = vmatpush1.msra.mxu0 0.0
    %466 = vmatprep.subr.mxu0 0.0
    %467 = vmatpush1.msra.mxu0 0.0
    %468 = vmatprep.subr.mxu0 0.0
    %469 = vmatpush1.msra.mxu0 0.0
    %470 = vmatprep.subr.mxu0 0.0
    %471 = vmatpush1.msra.mxu0 0.0
    %472 = vmatprep.subr.mxu0 0.0
    %473 = vmatpush1.msra.mxu0 0.0
    %474 = vmatprep.subr.mxu0 0.0
    %475 = vmatpush1.msra.mxu0 0.0
    %476 = vmatprep.subr.mxu0 0.0
    %477 = vmatpush1.msra.mxu0 0.0
    %478 = vmatprep.subr.mxu0 0.0
    %479 = vmatpush1.msra.mxu0 0.0
    %480 = vmatprep.subr.mxu0 0.0
    %481 = vmatpush1.msra.mxu0 0.0
    %482 = vmatprep.subr.mxu0 0.0
    %483 = vmatpush1.msra.mxu0 0.0
    %484 = vmatprep.subr.mxu0 0.0
    %485 = vmatpush1.msra.mxu0 0.0
    %486 = vmatprep.subr.mxu0 0.0
    %487 = vmatpush1.msra.mxu0 0.0
    %488 = vmatprep.subr.mxu0 0.0
    %489 = vmatpush1.msra.mxu0 0.0
    %490 = vmatprep.subr.mxu0 0.0
    %491 = vmatpush1.msra.mxu0 0.0
    %492 = vmatprep.subr.mxu0 0.0
    %493 = vmatpush1.msra.mxu0 0.0
    %494 = vmatprep.subr.mxu0 0.0
    %495 = vmatpush1.msra.mxu0 0.0
    %496 = vmatprep.mubr.f32.mxu0 0.0
    %v497 = vand.u32 %v57, 4294901760
    %498 = vmatmul.mubr.f32.gmra.mrb[0].mxu0 %v497
    %v499 = vpop.f32.mrb[0].mxu0
    %v500 = vadd.f32 %v409, %v499
    %v501 = vpop.f32.mrb[0].mxu0
    %502 = vmatprep.mubr.f32.mxu0 0.0
    %v503 = vand.u32 %v60, 4294901760
    %504 = vmatmul.mubr.f32.gmra.mrb[0].mxu0 %v503
    %v505 = vpop.f32.mrb[0].mxu0
    %v506 = vadd.f32 %v417, %v505
    %v507 = vpop.f32.mrb[0].mxu0
    %508 = vdwg.mxu0
    %509 = vmatprep.subr.mxu0 0.0
    %v510 = vand.u32 %v51, 4294901760
    %511 = vmatpush1.msra.mxu0 %v510
    %512 = vmatprep.subr.mxu0 0.0
    %v513 = vand.u32 %v52, 4294901760
    %514 = vmatpush1.msra.mxu0 %v513
    %515 = vmatprep.subr.mxu0 0.0
    %v516 = vand.u32 %v53, 4294901760
    %517 = vmatpush1.msra.mxu0 %v516
    %518 = vmatprep.subr.mxu0 0.0
    %v519 = vand.u32 %v54, 4294901760
    %520 = vmatpush1.msra.mxu0 %v519
    %521 = vmatprep.subr.mxu0 0.0
    %522 = vmatpush1.msra.mxu0 0.0
    %523 = vmatprep.subr.mxu0 0.0
    %524 = vmatpush1.msra.mxu0 0.0
    %525 = vmatprep.subr.mxu0 0.0
    %526 = vmatpush1.msra.mxu0 0.0
    %527 = vmatprep.subr.mxu0 0.0
    %528 = vmatpush1.msra.mxu0 0.0
    %529 = vmatprep.subr.mxu0 0.0
    %530 = vmatpush1.msra.mxu0 0.0
    %531 = vmatprep.subr.mxu0 0.0
    %532 = vmatpush1.msra.mxu0 0.0
    %533 = vmatprep.subr.mxu0 0.0
    %534 = vmatpush1.msra.mxu0 0.0
    %535 = vmatprep.subr.mxu0 0.0
    %536 = vmatpush1.msra.mxu0 0.0
    %537 = vmatprep.subr.mxu0 0.0
    %538 = vmatpush1.msra.mxu0 0.0
    %539 = vmatprep.subr.mxu0 0.0
    %540 = vmatpush1.msra.mxu0 0.0
    %541 = vmatprep.subr.mxu0 0.0
    %542 = vmatpush1.msra.mxu0 0.0
    %543 = vmatprep.subr.mxu0 0.0
    %544 = vmatpush1.msra.mxu0 0.0
    %545 = vmatprep.subr.mxu0 0.0
    %546 = vmatpush1.msra.mxu0 0.0
    %547 = vmatprep.subr.mxu0 0.0
    %548 = vmatpush1.msra.mxu0 0.0
    %549 = vmatprep.subr.mxu0 0.0
    %550 = vmatpush1.msra.mxu0 0.0
    %551 = vmatprep.subr.mxu0 0.0
    %552 = vmatpush1.msra.mxu0 0.0
    %553 = vmatprep.subr.mxu0 0.0
    %554 = vmatpush1.msra.mxu0 0.0
    %555 = vmatprep.subr.mxu0 0.0
    %556 = vmatpush1.msra.mxu0 0.0
    %557 = vmatprep.subr.mxu0 0.0
    %558 = vmatpush1.msra.mxu0 0.0
    %559 = vmatprep.subr.mxu0 0.0
    %560 = vmatpush1.msra.mxu0 0.0
    %561 = vmatprep.subr.mxu0 0.0
    %562 = vmatpush1.msra.mxu0 0.0
    %563 = vmatprep.subr.mxu0 0.0
    %564 = vmatpush1.msra.mxu0 0.0
    %565 = vmatprep.subr.mxu0 0.0
    %566 = vmatpush1.msra.mxu0 0.0
    %567 = vmatprep.subr.mxu0 0.0
    %568 = vmatpush1.msra.mxu0 0.0
    %569 = vmatprep.subr.mxu0 0.0
    %570 = vmatpush1.msra.mxu0 0.0
    %571 = vmatprep.subr.mxu0 0.0
    %572 = vmatpush1.msra.mxu0 0.0
    %573 = vmatprep.subr.mxu0 0.0
    %574 = vmatpush1.msra.mxu0 0.0
    %575 = vmatprep.subr.mxu0 0.0
    %576 = vmatpush1.msra.mxu0 0.0
    %577 = vmatprep.mubr.f32.mxu0 0.0
    %v578 = vand.u32 %v57, 4294901760
    %579 = vmatmul.mubr.f32.gmra.mrb[0].mxu0 %v578
    %v580 = vpop.f32.mrb[0].mxu0
    %v581 = vadd.f32 %v500, %v580
    %v582 = vpop.f32.mrb[0].mxu0
    %583 = vmatprep.mubr.f32.mxu0 0.0
    %v584 = vand.u32 %v60, 4294901760
    %585 = vmatmul.mubr.f32.gmra.mrb[0].mxu0 %v584
    %v586 = vpop.f32.mrb[0].mxu0
    %v587 = vadd.f32 %v506, %v586
    %v588 = vpop.f32.mrb[0].mxu0
    %589 = vdwg.mxu0
    %v590 = vadd.f32 %v47, %v581
    %v591 = vadd.f32 %v48, %v587
    %vm592 = vcmask 785408
    %593 = vst.msk [vmem:[#allocation2] sm:$0xff] %vm592, %v590
    %594 = vst.msk [vmem:[#allocation2 + $0x8] sm:$0xff] %vm592, %v591
    // Predicated region
    $region22: #{tpu_custom_call.1} parent=1 // pred_check
      %p595 = pneg %p40
    $region23: #{tpu_custom_call.1} parent=1 // pred_check_branch
      %597 = sbr.rel (%p595) target = $region25
    $region24: #{tpu_custom_call.1} parent=1 // pred_region
      %v598 = vld [vmem:[#allocation2] sm:$0xff]
      %v599 = vld [vmem:[#allocation2 + $0x8] sm:$0xff]
      %600 = vst.msk [vmem:[#allocation8] sm:$0xff] %vm592, %v598
      %601 = vst.msk [vmem:[#allocation8 + $0x8] sm:$0xff] %vm592, %v599
    $region25: #{tpu_custom_call.1} parent=1 // pred_fallthru
      _
    // Predicated region
    $region26: #{tpu_custom_call.1} parent=1 // pred_check
      _
    $region27: #{tpu_custom_call.1} parent=1 // pred_check_branch
      %603 = sbr.rel (0) target = $region29
    $region28: #{tpu_custom_call.1} parent=1 // pred_region
      %s605 = ssub.s32 256, 256
      %606 = vsyncadd [#allocation5], %s605
      %s607 = sshll.u32 [#allocation8], 4
      %s608 = int_to_ptr.vmem [resolvable:$true] %s607
      %613 = dma.vmem_to_hbm [thread:$0]  %s608, 256, %s2, [#allocation5], 128, 128, 8
    $region29: #{tpu_custom_call.1} parent=1 // pred_fallthru
      _
    // Predicated region
    $region30: #{tpu_custom_call.1} parent=1 // pred_check
      _
    $region31: #{tpu_custom_call.1} parent=1 // pred_check_branch
      %615 = sbr.rel (0) target = $region33
    $region32: #{tpu_custom_call.1} parent=1 // pred_region
      %616 = dma.done [#allocation5], 256
    $region33: #{tpu_custom_call.1} parent=1 // pred_fallthru
      _
    %617 = vsyncpa [#allocation4], 1
    %618 = vsyncpa [#allocation7], 1
    %619 = vsyncpa [#allocation5], 1

</llo_original>
